<compile_context>
chip_gen: v7x
topology: tpu7x:2x2x1
jax: 0.10.0
libtpu: 0.0.40
codegen_flags: <defaults>
</compile_context>

<pallas_src>
import functools

import numpy as np

import jax
import jax.numpy as jnp
from jax.experimental import pallas as pl
from jax.experimental.pallas import tpu as pltpu


def _round_up(x: int, m: int) -> int:
    return ((x + m - 1) // m) * m


def _roi_ce_partial_kernel(bounds_ref, x_ref, o_ref, *, class_index: int, tile_rows: int):
    """One grid step == one flat tile of rows of the stacked logits.

    bounds_ref : VMEM (2, L) int32  -- row 0: per-image start row, row 1: end row
                                       (lane j belongs to image j; unused lanes 0/0)
    x_ref      : VMEM (tile, C)     -- this tile's class logits (any float dtype)
    o_ref      : VMEM (1, 1, L) f32 -- per-image partial CE sums for this tile
    """
    t = pl.program_id(0)

    x = x_ref[...].astype(jnp.float32)                       # (tile, C)

    # Row-wise stable logsumexp.  The exp-row-sum uses the MXU (ones matvec) so
    # only the max goes through the XLU lane-reduce.
    m = jnp.max(x, axis=-1, keepdims=True)                   # (tile, 1)   XLU
    ex = jnp.exp(x - m)                                      # (tile, C)   EUP
    ones_c = jnp.ones((x.shape[-1], 1), jnp.float32)
    s = jnp.dot(ex, ones_c, preferred_element_type=jnp.float32)   # (tile, 1) MXU
    lse = m + jnp.log(s)                                     # (tile, 1)
    per_row = lse - x[:, class_index:class_index + 1]        # CE per box, (tile, 1)

    # Per-image partial sums: lane j accumulates rows with start_j <= row < end_j.
    # Padded rows of the last tile have row >= total_boxes >= every end_j, so
    # they (and any garbage they produced above) are excluded here.
    rows = t * tile_rows + jax.lax.broadcasted_iota(
        jnp.int32, (per_row.shape[0], 1), 0)                 # global row ids
    starts = bounds_ref[0:1, :]                              # (1, L)
    ends = bounds_ref[1:2, :]                                 # (1, L)
    valid = (rows >= starts) & (rows < ends)                  # (tile, L)
    partial = jnp.sum(jnp.where(valid, per_row, 0.0),
                      axis=0, keepdims=True)                  # (1, L)
    o_ref[...] = partial[None]                                # (1, 1, L)


def roi_head_target_class(roi_heads_class_logits, proposals,
                          class_index: int = 0, targeted: bool = True,
                          tile_rows: int = 512):
    """JAX/Pallas equivalent of RoIHeadTargetClass.forward.

    roi_heads_class_logits: (total_boxes, num_classes) array (f32 or bf16).
    proposals: list of per-image box arrays, shape (boxes_i, 4); only shape[0]
               is used (static, mirrors the PyTorch module).
    Returns: (num_images,) gain vector in the input dtype.
    """
    boxes_per_image = [int(p.shape[0]) for p in proposals]
    num_images = len(boxes_per_image)
    total_boxes, num_classes = roi_heads_class_logits.shape
    assert sum(boxes_per_image) == total_boxes
    assert total_boxes > 0 and num_images > 0

    # Flat row tile: multiple of 8 sublanes, capped at tile_rows; a single tile
    # may overhang total_boxes (Pallas pads the block, kernel masks those rows).
    tile = min(_round_up(total_boxes, 8), max(8, _round_up(tile_rows, 8)))
    num_tiles = int(pl.cdiv(total_boxes, tile))

    # Static per-image [start, end) row ranges, padded to a lane-dense width.
    lanes = 128 * max(1, -(-num_images // 128))
    starts_np = np.zeros((lanes,), np.int32)
    ends_np = np.zeros((lanes,), np.int32)
    off = 0
    for i, b in enumerate(boxes_per_image):
        starts_np[i] = off
        ends_np[i] = off + b
        off += b
    bounds = jnp.asarray(np.stack([starts_np, ends_np], axis=0))   # (2, lanes) i32

    n_elems = total_boxes * num_classes
    mask_elems = num_tiles * tile * lanes
    cost = pl.CostEstimate(
        flops=6 * n_elems + 4 * mask_elems,
        transcendentals=n_elems + total_boxes,
        bytes_accessed=int(n_elems * roi_heads_class_logits.dtype.itemsize
                           + bounds.size * 4
                           + num_tiles * lanes * 4),
    )

    partials = pl.pallas_call(
        functools.partial(_roi_ce_partial_kernel,
                          class_index=int(class_index), tile_rows=tile),
        out_shape=jax.ShapeDtypeStruct((num_tiles, 1, lanes), jnp.float32),
        grid_spec=pltpu.PrefetchScalarGridSpec(
            num_scalar_prefetch=0,
            grid=(num_tiles,),
            in_specs=[
                # Small per-image bounds table, same block every step.
                pl.BlockSpec((2, lanes), lambda t: (0, 0)),
                # One flat row tile of the stacked logits per step (class dim is
                # the full array extent, so the (8,128) rule is satisfied).
                pl.BlockSpec((tile, num_classes), lambda t: (t, 0)),
            ],
            out_specs=pl.BlockSpec((1, 1, lanes), lambda t: (t, 0, 0)),
        ),
        compiler_params=pltpu.CompilerParams(
            # Row tiles are independent (pure partial sums) -> shardable across
            # both v7x TensorCores even when num_images == 1.
            dimension_semantics=("parallel",),
        ),
        cost_estimate=cost,
    )(bounds, roi_heads_class_logits)

    # Tiny static epilogue: sum partials over tiles, scale by ±1/count.
    counts_np = np.asarray(boxes_per_image, np.float32)
    sign = -1.0 if targeted else 1.0
    scale_np = np.where(counts_np > 0, sign / np.maximum(counts_np, 1.0), np.nan)
    sums = jnp.sum(partials[:, 0, :num_images], axis=0)            # (num_images,)
    gains = sums * jnp.asarray(scale_np, jnp.float32)
    return gains.astype(roi_heads_class_logits.dtype)


def _reference(roi_heads_class_logits, boxes_per_image,
               class_index: int = 0, targeted: bool = True):
    gains = []
    off = 0
    for b in boxes_per_image:
        seg = roi_heads_class_logits[off:off + b].astype(jnp.float32)
        lse = jax.scipy.special.logsumexp(seg, axis=-1)
        ce = jnp.mean(lse - seg[:, class_index])
        gains.append(-ce if targeted else ce)
        off += b
    return jnp.stack(gains).astype(roi_heads_class_logits.dtype)


if __name__ == "__main__":
    key = jax.random.PRNGKey(0)
    k1, k2, k3 = jax.random.split(key, 3)
    num_classes = 16

    # Case 1: equal counts (2 images x 64 boxes), targeted background class.
    logits_eq = jax.random.normal(k1, (2 * 64, num_classes), dtype=jnp.float32)
    props_eq = [jnp.zeros((64, 4), jnp.float32), jnp.zeros((64, 4), jnp.float32)]
    out_eq = roi_head_target_class(logits_eq, props_eq, class_index=0, targeted=True)

    # Case 2: ragged counts (48 + 24), untargeted, class 3; small tile_rows to
    # exercise the multi-tile path with a padded (masked) last tile.
    logits_ne = jax.random.normal(k2, (48 + 24, num_classes), dtype=jnp.float32)
    props_ne = [jnp.zeros((48, 4), jnp.float32), jnp.zeros((24, 4), jnp.float32)]
    out_ne = roi_head_target_class(logits_ne, props_ne, class_index=3,
                                   targeted=False, tile_rows=32)

    # Case 3: bf16 logits stay bf16 on the wire (f32 accumulation in-kernel).
    logits_bf = jax.random.normal(k3, (80, num_classes), dtype=jnp.bfloat16)
    props_bf = [jnp.zeros((80, 4), jnp.float32)]
    out_bf = roi_head_target_class(logits_bf, props_bf, class_index=1, targeted=True)

    jax.block_until_ready((out_eq, out_ne, out_bf))

    ref_eq = _reference(logits_eq, [64, 64], class_index=0, targeted=True)
    ref_ne = _reference(logits_ne, [48, 24], class_index=3, targeted=False)
    ref_bf = _reference(logits_bf, [80], class_index=1, targeted=True)

    assert out_eq.shape == ref_eq.shape == (2,)
    assert out_ne.shape == ref_ne.shape == (2,)
    assert out_bf.shape == ref_bf.shape == (1,)
    assert jnp.allclose(out_eq, ref_eq, atol=1e-5, rtol=1e-5)
    assert jnp.allclose(out_ne, ref_ne, atol=1e-5, rtol=1e-5)
    assert jnp.allclose(out_bf.astype(jnp.float32), ref_bf.astype(jnp.float32),
                        atol=5e-2, rtol=5e-2)

    print("KERNEL_OK")
</pallas_src>

<mosaic_0001>
module attributes {stable_mosaic.version = 11 : i64} {
  func.func @_roi_ce_partial_kernel(%arg0: i32, %arg1: memref<2x128xi32, #tpu.memory_space<vmem>>, %arg2: memref<128x16xf32, #tpu.memory_space<vmem>>, %arg3: memref<1x1x128xf32, #tpu.memory_space<vmem>>) attributes {dimension_semantics = [#tpu.dimension_semantics<parallel>], iteration_bounds = array<i64: 1>, scalar_prefetch = 0 : i64, scratch_operands = 0 : i64, tpu.core_type = #tpu.core_type<tc>, window_params = [{pipeline_mode = #tpu.pipeline_mode<synchronous>, transform_indices = @transform_0, window_bounds = array<i64: 2, 128>}, {transform_indices = @transform_1, window_bounds = array<i64: 128, 16>}, {transform_indices = @transform_2, window_bounds = array<i64: 1, 1, 128>}]} {
    %c0 = arith.constant 0 : index
    %c0_0 = arith.constant 0 : index
    %0 = vector.load %arg2[%c0, %c0_0] : memref<128x16xf32, #tpu.memory_space<vmem>>, vector<128x16xf32>
    %cst = arith.constant dense<0xFF800000> : vector<128xf32>
    %1 = vector.multi_reduction <maximumf>, %0, %cst [1] : vector<128x16xf32> to vector<128xf32>
    %2 = vector.shape_cast %1 : vector<128xf32> to vector<128x1xf32>
    %3 = vector.broadcast %2 : vector<128x1xf32> to vector<128x16xf32>
    %4 = arith.subf %0, %3 : vector<128x16xf32>
    %5 = math.exp %4 : vector<128x16xf32>
    %cst_1 = arith.constant 1.000000e+00 : f32
    %6 = vector.broadcast %cst_1 : f32 to vector<16x1xf32>
    %cst_2 = arith.constant dense<0.000000e+00> : vector<128x1xf32>
    %7 = tpu.matmul %5, %6, %cst_2 {dimension_numbers = #tpu.dot_dimension_numbers<[1], [0], [0], [1], [0, 0, 1, 1], [], []>} : vector<128x16xf32>, vector<16x1xf32>, vector<128x1xf32> -> vector<128x1xf32>
    %8 = math.log %7 : vector<128x1xf32>
    %9 = arith.addf %2, %8 : vector<128x1xf32>
    %10 = vector.extract_strided_slice %0 {offsets = [0, 0], sizes = [128, 1], strides = [1, 1]} : vector<128x16xf32> to vector<128x1xf32>
    %11 = arith.subf %9, %10 : vector<128x1xf32>
    %c128_i32 = arith.constant 128 : i32
    %12 = arith.muli %arg0, %c128_i32 : i32
    %13 = tpu.iota {dimensions = array<i32: 0>} : vector<128x1xi32>
    %14 = vector.broadcast %12 : i32 to vector<128x1xi32>
    %15 = arith.addi %14, %13 : vector<128x1xi32>
    %c0_3 = arith.constant 0 : index
    %c0_4 = arith.constant 0 : index
    %16 = vector.load %arg1[%c0_3, %c0_4] : memref<2x128xi32, #tpu.memory_space<vmem>>, vector<1x128xi32>
    %c1 = arith.constant 1 : index
    %c0_5 = arith.constant 0 : index
    %17 = vector.load %arg1[%c1, %c0_5] : memref<2x128xi32, #tpu.memory_space<vmem>>, vector<1x128xi32>
    %18 = vector.broadcast %15 : vector<128x1xi32> to vector<128x128xi32>
    %19 = vector.broadcast %16 : vector<1x128xi32> to vector<128x128xi32>
    %20 = arith.cmpi sge, %18, %19 : vector<128x128xi32>
    %21 = vector.broadcast %15 : vector<128x1xi32> to vector<128x128xi32>
    %22 = vector.broadcast %17 : vector<1x128xi32> to vector<128x128xi32>
    %23 = arith.cmpi slt, %21, %22 : vector<128x128xi32>
    %24 = arith.andi %20, %23 : vector<128x128xi1>
    %cst_6 = arith.constant 0.000000e+00 : f32
    %25 = vector.shape_cast %11 : vector<128x1xf32> to vector<128x1xf32>
    %26 = vector.broadcast %25 : vector<128x1xf32> to vector<128x128xf32>
    %27 = vector.broadcast %cst_6 : f32 to vector<128x128xf32>
    %28 = arith.select %24, %26, %27 : vector<128x128xi1>, vector<128x128xf32>
    %cst_7 = arith.constant dense<0.000000e+00> : vector<128xf32>
    %29 = vector.multi_reduction <add>, %28, %cst_7 [0] : vector<128x128xf32> to vector<128xf32>
    %30 = vector.shape_cast %29 : vector<128xf32> to vector<1x128xf32>
    %31 = vector.shape_cast %30 : vector<1x128xf32> to vector<1x1x128xf32>
    %c0_8 = arith.constant 0 : index
    %c0_9 = arith.constant 0 : index
    %c0_10 = arith.constant 0 : index
    %32 = vector.load %arg3[%c0_8, %c0_9, %c0_10] : memref<1x1x128xf32, #tpu.memory_space<vmem>>, vector<1x1x128xf32>
    tpu.vector_store %arg3[%c0_8, %c0_9, %c0_10], %31 {strides = array<i32>} : memref<1x1x128xf32, #tpu.memory_space<vmem>>, vector<1x1x128xf32>,
    return
  }
  func.func @transform_0(%arg0: i32) -> (i32, i32) {
    %c0_i32 = arith.constant 0 : i32
    %c0_i32_0 = arith.constant 0 : i32
    %c0_i32_1 = arith.constant 0 : i32
    return %c0_i32, %c0_i32_0 : i32, i32
  }
  func.func @transform_1(%arg0: i32) -> (i32, i32) {
    %c0_i32 = arith.constant 0 : i32
    %c0_i32_0 = arith.constant 0 : i32
    return %arg0, %c0_i32 : i32, i32
  }
  func.func @transform_2(%arg0: i32) -> (i32, i32, i32) {
    %c0_i32 = arith.constant 0 : i32
    %c0_i32_0 = arith.constant 0 : i32
    %c0_i32_1 = arith.constant 0 : i32
    return %arg0, %c0_i32, %c0_i32_0 : i32, i32, i32
  }
}

</mosaic_0001>

<llo_original>
// kernel: tpu_custom_call.1
$region0: #{tpu_custom_call.1}
  #allocation0 [shape = 'u32[]', space=smem, size = 0x4, offset = 0x4, fixed_abs, tag = 'smem constant byte address 0x4 - core index']
  #allocation1 [shape = 'u32[144,128]{1,0:T(1,128)}', space=vmem, size = 0x12000, scoped, tag = 'internal scratch']
  %s0 = inlined_call_operand.vmem [shape: s32[2,128], index: 0, kind: input, shape index: {}]
  %s1 = inlined_call_operand.vmem [shape: f32[128,16], index: 1, kind: input, shape index: {}]
  %s2 = inlined_call_operand.hbm [shape: f32[1,1,128], index: 2, kind: output, shape index: {}]
  %s3 = sld [smem:[#allocation0]]
  $region18: #{tpu_custom_call.1} parent=0
    _
  %s5 = ssub.s32 1, %s3
  %s6 = scalar_select 0, %s5, %s3
  $region1: #{tpu_custom_call.1} parent=0
    #allocation2 [shape = 'u8[512]{0}', space=vmem, size = 0x400, scoped, tag = 'output window, operand 0, single buffered']
    #allocation3 [shape = 's32[1]{0}', space=sflag, size = 0x4, scoped, tag = 'scoped memory for tpu_custom_call.1']
    %7 = vsyncpa [#allocation3], 0
    // Predicated region
    $region2: #{tpu_custom_call.1} parent=1 // pred_check
      _
    $region3: #{tpu_custom_call.1} parent=1 // pred_check_branch
      %9 = sbr.rel (0) target = $region5
    $region4: #{tpu_custom_call.1} parent=1 // pred_region
      _
    $region5: #{tpu_custom_call.1} parent=1 // pred_fallthru
      _
    // Predicated region
    $region6: #{tpu_custom_call.1} parent=1 // pred_check
      _
    $region7: #{tpu_custom_call.1} parent=1 // pred_check_branch
      %11 = sbr.rel (0) target = $region9
    $region8: #{tpu_custom_call.1} parent=1 // pred_region
      _
    $region9: #{tpu_custom_call.1} parent=1 // pred_fallthru
      _
    %v12 = vld [vmem:[%s1] sm:$0xff]
    %v13 = vld [vmem:[%s1 + $0x8] sm:$0xff]
    %v14 = vld [vmem:[%s1 + $0x10] sm:$0xff]
    %v15 = vld [vmem:[%s1 + $0x18] sm:$0xff]
    %v16 = vld [vmem:[%s1 + $0x20] sm:$0xff]
    %v17 = vld [vmem:[%s1 + $0x28] sm:$0xff]
    %v18 = vld [vmem:[%s1 + $0x30] sm:$0xff]
    %v19 = vld [vmem:[%s1 + $0x38] sm:$0xff]
    %v20 = vld [vmem:[%s1 + $0x40] sm:$0xff]
    %v21 = vld [vmem:[%s1 + $0x48] sm:$0xff]
    %v22 = vld [vmem:[%s1 + $0x50] sm:$0xff]
    %v23 = vld [vmem:[%s1 + $0x58] sm:$0xff]
    %v24 = vld [vmem:[%s1 + $0x60] sm:$0xff]
    %v25 = vld [vmem:[%s1 + $0x68] sm:$0xff]
    %v26 = vld [vmem:[%s1 + $0x70] sm:$0xff]
    %v27 = vld [vmem:[%s1 + $0x78] sm:$0xff]
    %vm28 = vcmask 130048
    %v29 = vsel %vm28, %v12, -inf
    %30 = vmax.xlane.f32.xlu0 %v29
    %v31 = vpop.xlane.xlu0 %30
    %v32 = vsel %vm28, %v13, -inf
    %33 = vmax.xlane.f32.xlu0 %v32
    %v34 = vpop.xlane.xlu0 %33
    %v35 = vsel %vm28, %v14, -inf
    %36 = vmax.xlane.f32.xlu0 %v35
    %v37 = vpop.xlane.xlu0 %36
    %v38 = vsel %vm28, %v15, -inf
    %39 = vmax.xlane.f32.xlu0 %v38
    %v40 = vpop.xlane.xlu0 %39
    %v41 = vsel %vm28, %v16, -inf
    %42 = vmax.xlane.f32.xlu0 %v41
    %v43 = vpop.xlane.xlu0 %42
    %v44 = vsel %vm28, %v17, -inf
    %45 = vmax.xlane.f32.xlu0 %v44
    %v46 = vpop.xlane.xlu0 %45
    %v47 = vsel %vm28, %v18, -inf
    %48 = vmax.xlane.f32.xlu0 %v47
    %v49 = vpop.xlane.xlu0 %48
    %v50 = vsel %vm28, %v19, -inf
    %51 = vmax.xlane.f32.xlu0 %v50
    %v52 = vpop.xlane.xlu0 %51
    %v53 = vsel %vm28, %v20, -inf
    %54 = vmax.xlane.f32.xlu0 %v53
    %v55 = vpop.xlane.xlu0 %54
    %v56 = vsel %vm28, %v21, -inf
    %57 = vmax.xlane.f32.xlu0 %v56
    %v58 = vpop.xlane.xlu0 %57
    %v59 = vsel %vm28, %v22, -inf
    %60 = vmax.xlane.f32.xlu0 %v59
    %v61 = vpop.xlane.xlu0 %60
    %v62 = vsel %vm28, %v23, -inf
    %63 = vmax.xlane.f32.xlu0 %v62
    %v64 = vpop.xlane.xlu0 %63
    %v65 = vsel %vm28, %v24, -inf
    %66 = vmax.xlane.f32.xlu0 %v65
    %v67 = vpop.xlane.xlu0 %66
    %v68 = vsel %vm28, %v25, -inf
    %69 = vmax.xlane.f32.xlu0 %v68
    %v70 = vpop.xlane.xlu0 %69
    %v71 = vsel %vm28, %v26, -inf
    %72 = vmax.xlane.f32.xlu0 %v71
    %v73 = vpop.xlane.xlu0 %72
    %v74 = vsel %vm28, %v27, -inf
    %75 = vmax.xlane.f32.xlu0 %v74
    %v76 = vpop.xlane.xlu0 %75
    %v77 = vsub.f32 %v12, %v31
    %v78 = vsub.f32 %v13, %v34
    %v79 = vsub.f32 %v14, %v37
    %v80 = vsub.f32 %v15, %v40
    %v81 = vsub.f32 %v16, %v43
    %v82 = vsub.f32 %v17, %v46
    %v83 = vsub.f32 %v18, %v49
    %v84 = vsub.f32 %v19, %v52
    %v85 = vsub.f32 %v20, %v55
    %v86 = vsub.f32 %v21, %v58
    %v87 = vsub.f32 %v22, %v61
    %v88 = vsub.f32 %v23, %v64
    %v89 = vsub.f32 %v24, %v67
    %v90 = vsub.f32 %v25, %v70
    %v91 = vsub.f32 %v26, %v73
    %v92 = vsub.f32 %v27, %v76
    %v93 = vmul.f32 %v77, 1.442695
    %v94 = vpow.pop %v93
    %v95 = vmul.f32 %v78, 1.442695
    %v96 = vpow.pop %v95
    %v97 = vmul.f32 %v79, 1.442695
    %v98 = vpow.pop %v97
    %v99 = vmul.f32 %v80, 1.442695
    %v100 = vpow.pop %v99
    %v101 = vmul.f32 %v81, 1.442695
    %v102 = vpow.pop %v101
    %v103 = vmul.f32 %v82, 1.442695
    %v104 = vpow.pop %v103
    %v105 = vmul.f32 %v83, 1.442695
    %v106 = vpow.pop %v105
    %v107 = vmul.f32 %v84, 1.442695
    %v108 = vpow.pop %v107
    %v109 = vmul.f32 %v85, 1.442695
    %v110 = vpow.pop %v109
    %v111 = vmul.f32 %v86, 1.442695
    %v112 = vpow.pop %v111
    %v113 = vmul.f32 %v87, 1.442695
    %v114 = vpow.pop %v113
    %v115 = vmul.f32 %v88, 1.442695
    %v116 = vpow.pop %v115
    %v117 = vmul.f32 %v89, 1.442695
    %v118 = vpow.pop %v117
    %v119 = vmul.f32 %v90, 1.442695
    %v120 = vpow.pop %v119
    %v121 = vmul.f32 %v91, 1.442695
    %v122 = vpow.pop %v121
    %v123 = vmul.f32 %v92, 1.442695
    %v124 = vpow.pop %v123
    %v126 = vsel %vm28, %v94, 0
    %v129 = vsel %vm28, %v96, 0
    %v132 = vsel %vm28, %v98, 0
    %v135 = vsel %vm28, %v100, 0
    %v138 = vsel %vm28, %v102, 0
    %v141 = vsel %vm28, %v104, 0
    %v144 = vsel %vm28, %v106, 0
    %v147 = vsel %vm28, %v108, 0
    %v150 = vsel %vm28, %v110, 0
    %v153 = vsel %vm28, %v112, 0
    %v156 = vsel %vm28, %v114, 0
    %v159 = vsel %vm28, %v116, 0
    %v162 = vsel %vm28, %v118, 0
    %v165 = vsel %vm28, %v120, 0
    %v168 = vsel %vm28, %v122, 0
    %v171 = vsel %vm28, %v124, 0
    %173 = vmatprep.subr.mxu0 0.0
    %174 = vmatpush1.msra.mxu0 1.0
    %175 = vmatprep.subr.mxu0 0.0
    %176 = vmatpush1.msra.mxu0 1.0
    %177 = vmatprep.subr.mxu0 0.0
    %178 = vmatpush1.msra.mxu0 0.0
    %179 = vmatprep.subr.mxu0 0.0
    %180 = vmatpush1.msra.mxu0 0.0
    %181 = vmatprep.subr.mxu0 0.0
    %182 = vmatpush1.msra.mxu0 0.0
    %183 = vmatprep.subr.mxu0 0.0
    %184 = vmatpush1.msra.mxu0 0.0
    %185 = vmatprep.subr.mxu0 0.0
    %186 = vmatpush1.msra.mxu0 0.0
    %187 = vmatprep.subr.mxu0 0.0
    %188 = vmatpush1.msra.mxu0 0.0
    %189 = vmatprep.subr.mxu0 0.0
    %190 = vmatpush1.msra.mxu0 0.0
    %191 = vmatprep.subr.mxu0 0.0
    %192 = vmatpush1.msra.mxu0 0.0
    %193 = vmatprep.subr.mxu0 0.0
    %194 = vmatpush1.msra.mxu0 0.0
    %195 = vmatprep.subr.mxu0 0.0
    %196 = vmatpush1.msra.mxu0 0.0
    %197 = vmatprep.subr.mxu0 0.0
    %198 = vmatpush1.msra.mxu0 0.0
    %199 = vmatprep.subr.mxu0 0.0
    %200 = vmatpush1.msra.mxu0 0.0
    %201 = vmatprep.subr.mxu0 0.0
    %202 = vmatpush1.msra.mxu0 0.0
    %203 = vmatprep.subr.mxu0 0.0
    %204 = vmatpush1.msra.mxu0 0.0
    %205 = vmatprep.subr.mxu0 0.0
    %206 = vmatpush1.msra.mxu0 0.0
    %207 = vmatprep.subr.mxu0 0.0
    %208 = vmatpush1.msra.mxu0 0.0
    %209 = vmatprep.subr.mxu0 0.0
    %210 = vmatpush1.msra.mxu0 0.0
    %211 = vmatprep.subr.mxu0 0.0
    %212 = vmatpush1.msra.mxu0 0.0
    %213 = vmatprep.subr.mxu0 0.0
    %214 = vmatpush1.msra.mxu0 0.0
    %215 = vmatprep.subr.mxu0 0.0
    %216 = vmatpush1.msra.mxu0 0.0
    %217 = vmatprep.subr.mxu0 0.0
    %218 = vmatpush1.msra.mxu0 0.0
    %219 = vmatprep.subr.mxu0 0.0
    %220 = vmatpush1.msra.mxu0 0.0
    %221 = vmatprep.subr.mxu0 0.0
    %222 = vmatpush1.msra.mxu0 0.0
    %223 = vmatprep.subr.mxu0 0.0
    %224 = vmatpush1.msra.mxu0 0.0
    %225 = vmatprep.subr.mxu0 0.0
    %226 = vmatpush1.msra.mxu0 0.0
    %227 = vmatprep.subr.mxu0 0.0
    %228 = vmatpush1.msra.mxu0 0.0
    %229 = vmatprep.subr.mxu0 0.0
    %230 = vmatpush1.msra.mxu0 0.0
    %231 = vmatprep.subr.mxu0 0.0
    %232 = vmatpush1.msra.mxu0 0.0
    %233 = vmatprep.subr.mxu0 0.0
    %234 = vmatpush1.msra.mxu0 0.0
    %235 = vmatprep.subr.mxu0 0.0
    %236 = vmatpush1.msra.mxu0 0.0
    %237 = vmatprep.mubr.f32.mxu0 0.0
    %238 = vmatmul.mubr.f32.gmra.mrb[0].mxu0 %v126
    %v239 = vpop.f32.mrb[0].mxu0
    %v240 = vadd.f32 0.0, %v239
    %v241 = vpop.f32.mrb[0].mxu0
    %242 = vmatprep.mubr.f32.mxu0 0.0
    %243 = vmatmul.mubr.f32.gmra.mrb[0].mxu0 %v129
    %v244 = vpop.f32.mrb[0].mxu0
    %v245 = vadd.f32 0.0, %v244
    %v246 = vpop.f32.mrb[0].mxu0
    %247 = vmatprep.mubr.f32.mxu0 0.0
    %248 = vmatmul.mubr.f32.gmra.mrb[0].mxu0 %v132
    %v249 = vpop.f32.mrb[0].mxu0
    %v250 = vadd.f32 0.0, %v249
    %v251 = vpop.f32.mrb[0].mxu0
    %252 = vmatprep.mubr.f32.mxu0 0.0
    %253 = vmatmul.mubr.f32.gmra.mrb[0].mxu0 %v135
    %v254 = vpop.f32.mrb[0].mxu0
    %v255 = vadd.f32 0.0, %v254
    %v256 = vpop.f32.mrb[0].mxu0
    %257 = vmatprep.mubr.f32.mxu0 0.0
    %258 = vmatmul.mubr.f32.gmra.mrb[0].mxu0 %v138
    %v259 = vpop.f32.mrb[0].mxu0
    %v260 = vadd.f32 0.0, %v259
    %v261 = vpop.f32.mrb[0].mxu0
    %262 = vmatprep.mubr.f32.mxu0 0.0
    %263 = vmatmul.mubr.f32.gmra.mrb[0].mxu0 %v141
    %v264 = vpop.f32.mrb[0].mxu0
    %v265 = vadd.f32 0.0, %v264
    %v266 = vpop.f32.mrb[0].mxu0
    %267 = vmatprep.mubr.f32.mxu0 0.0
    %268 = vmatmul.mubr.f32.gmra.mrb[0].mxu0 %v144
    %v269 = vpop.f32.mrb[0].mxu0
    %v270 = vadd.f32 0.0, %v269
    %v271 = vpop.f32.mrb[0].mxu0
    %272 = vmatprep.mubr.f32.mxu0 0.0
    %273 = vmatmul.mubr.f32.gmra.mrb[0].mxu0 %v147
    %v274 = vpop.f32.mrb[0].mxu0
    %v275 = vadd.f32 0.0, %v274
    %v276 = vpop.f32.mrb[0].mxu0
    %277 = vmatprep.mubr.f32.mxu0 0.0
    %278 = vmatmul.mubr.f32.gmra.mrb[0].mxu0 %v150
    %v279 = vpop.f32.mrb[0].mxu0
    %v280 = vadd.f32 0.0, %v279
    %v281 = vpop.f32.mrb[0].mxu0
    %282 = vmatprep.mubr.f32.mxu0 0.0
    %283 = vmatmul.mubr.f32.gmra.mrb[0].mxu0 %v153
    %v284 = vpop.f32.mrb[0].mxu0
    %v285 = vadd.f32 0.0, %v284
    %v286 = vpop.f32.mrb[0].mxu0
    %287 = vmatprep.mubr.f32.mxu0 0.0
    %288 = vmatmul.mubr.f32.gmra.mrb[0].mxu0 %v156
    %v289 = vpop.f32.mrb[0].mxu0
    %v290 = vadd.f32 0.0, %v289
    %v291 = vpop.f32.mrb[0].mxu0
    %292 = vmatprep.mubr.f32.mxu0 0.0
    %293 = vmatmul.mubr.f32.gmra.mrb[0].mxu0 %v159
    %v294 = vpop.f32.mrb[0].mxu0
    %v295 = vadd.f32 0.0, %v294
    %v296 = vpop.f32.mrb[0].mxu0
    %297 = vmatprep.mubr.f32.mxu0 0.0
    %298 = vmatmul.mubr.f32.gmra.mrb[0].mxu0 %v162
    %v299 = vpop.f32.mrb[0].mxu0
    %v300 = vadd.f32 0.0, %v299
    %v301 = vpop.f32.mrb[0].mxu0
    %302 = vmatprep.mubr.f32.mxu0 0.0
    %303 = vmatmul.mubr.f32.gmra.mrb[0].mxu0 %v165
    %v304 = vpop.f32.mrb[0].mxu0
    %v305 = vadd.f32 0.0, %v304
    %v306 = vpop.f32.mrb[0].mxu0
    %307 = vmatprep.mubr.f32.mxu0 0.0
    %308 = vmatmul.mubr.f32.gmra.mrb[0].mxu0 %v168
    %v309 = vpop.f32.mrb[0].mxu0
    %v310 = vadd.f32 0.0, %v309
    %v311 = vpop.f32.mrb[0].mxu0
    %312 = vmatprep.mubr.f32.mxu0 0.0
    %313 = vmatmul.mubr.f32.gmra.mrb[0].mxu0 %v171
    %v314 = vpop.f32.mrb[0].mxu0
    %v315 = vadd.f32 0.0, %v314
    %v316 = vpop.f32.mrb[0].mxu0
    %317 = vdwg.mxu0
    %v318 = vlog2.pop %v240
    %v319 = vmul.f32 %v318, 0.6931472
    %v320 = vlog2.pop %v245
    %v321 = vmul.f32 %v320, 0.6931472
    %v322 = vlog2.pop %v250
    %v323 = vmul.f32 %v322, 0.6931472
    %v324 = vlog2.pop %v255
    %v325 = vmul.f32 %v324, 0.6931472
    %v326 = vlog2.pop %v260
    %v327 = vmul.f32 %v326, 0.6931472
    %v328 = vlog2.pop %v265
    %v329 = vmul.f32 %v328, 0.6931472
    %v330 = vlog2.pop %v270
    %v331 = vmul.f32 %v330, 0.6931472
    %v332 = vlog2.pop %v275
    %v333 = vmul.f32 %v332, 0.6931472
    %v334 = vlog2.pop %v280
    %v335 = vmul.f32 %v334, 0.6931472
    %v336 = vlog2.pop %v285
    %v337 = vmul.f32 %v336, 0.6931472
    %v338 = vlog2.pop %v290
    %v339 = vmul.f32 %v338, 0.6931472
    %v340 = vlog2.pop %v295
    %v341 = vmul.f32 %v340, 0.6931472
    %v342 = vlog2.pop %v300
    %v343 = vmul.f32 %v342, 0.6931472
    %v344 = vlog2.pop %v305
    %v345 = vmul.f32 %v344, 0.6931472
    %v346 = vlog2.pop %v310
    %v347 = vmul.f32 %v346, 0.6931472
    %v348 = vlog2.pop %v315
    %v349 = vmul.f32 %v348, 0.6931472
    %v350 = vadd.f32 %v31, %v319
    %v351 = vadd.f32 %v34, %v321
    %v352 = vadd.f32 %v37, %v323
    %v353 = vadd.f32 %v40, %v325
    %v354 = vadd.f32 %v43, %v327
    %v355 = vadd.f32 %v46, %v329
    %v356 = vadd.f32 %v49, %v331
    %v357 = vadd.f32 %v52, %v333
    %v358 = vadd.f32 %v55, %v335
    %v359 = vadd.f32 %v58, %v337
    %v360 = vadd.f32 %v61, %v339
    %v361 = vadd.f32 %v64, %v341
    %v362 = vadd.f32 %v67, %v343
    %v363 = vadd.f32 %v70, %v345
    %v364 = vadd.f32 %v73, %v347
    %v365 = vadd.f32 %v76, %v349
    %v366 = vsub.f32 %v350, %v12
    %v367 = vsub.f32 %v351, %v13
    %v368 = vsub.f32 %v352, %v14
    %v369 = vsub.f32 %v353, %v15
    %v370 = vsub.f32 %v354, %v16
    %v371 = vsub.f32 %v355, %v17
    %v372 = vsub.f32 %v356, %v18
    %v373 = vsub.f32 %v357, %v19
    %v374 = vsub.f32 %v358, %v20
    %v375 = vsub.f32 %v359, %v21
    %v376 = vsub.f32 %v360, %v22
    %v377 = vsub.f32 %v361, %v23
    %v378 = vsub.f32 %v362, %v24
    %v379 = vsub.f32 %v363, %v25
    %v380 = vsub.f32 %v364, %v26
    %v381 = vsub.f32 %v365, %v27
    %s382 = smul.u32 0, 128
    %v383 = vlaneseq
    %v384 = vshrl.u32 %v383, 7
    %v385 = vadd.s32 %v384, 8
    %v386 = vadd.s32 %v384, 16
    %v387 = vadd.s32 %v384, 24
    %v388 = vadd.s32 %v384, 32
    %v389 = vadd.s32 %v384, 40
    %v390 = vadd.s32 %v384, 48
    %v391 = vadd.s32 %v384, 56
    %v392 = vadd.s32 %v384, 64
    %v393 = vadd.s32 %v384, 72
    %v394 = vadd.s32 %v384, 80
    %v395 = vadd.s32 %v384, 88
    %v396 = vadd.s32 %v384, 96
    %v397 = vadd.s32 %v384, 104
    %v398 = vadd.s32 %v384, 112
    %v399 = vadd.s32 %v384, 120
    %v400 = vstv %s382
    %v401 = vadd.s32 %v400, %v384
    %v402 = vadd.s32 %v400, %v385
    %v403 = vadd.s32 %v400, %v386
    %v404 = vadd.s32 %v400, %v387
    %v405 = vadd.s32 %v400, %v388
    %v406 = vadd.s32 %v400, %v389
    %v407 = vadd.s32 %v400, %v390
    %v408 = vadd.s32 %v400, %v391
    %v409 = vadd.s32 %v400, %v392
    %v410 = vadd.s32 %v400, %v393
    %v411 = vadd.s32 %v400, %v394
    %v412 = vadd.s32 %v400, %v395
    %v413 = vadd.s32 %v400, %v396
    %v414 = vadd.s32 %v400, %v397
    %v415 = vadd.s32 %v400, %v398
    %v416 = vadd.s32 %v400, %v399
    %v417 = vld [vmem:[%s0] sm:$0x1]
    %v418 = vld [vmem:[%s0 + $0x1] sm:$0x1]
    %v419 = vlaneseq
    %v420 = vshrl.u32 %v419, 7
    %v421 = vsub.s32 0, %v420
    %v422 = vrot.slane %v417, %v421
    %vm423 = vcmp.ge.s32.totalorder %v401, %v422
    %vm424 = vcmp.ge.s32.totalorder %v402, %v422
    %vm425 = vcmp.ge.s32.totalorder %v403, %v422
    %vm426 = vcmp.ge.s32.totalorder %v404, %v422
    %vm427 = vcmp.ge.s32.totalorder %v405, %v422
    %vm428 = vcmp.ge.s32.totalorder %v406, %v422
    %vm429 = vcmp.ge.s32.totalorder %v407, %v422
    %vm430 = vcmp.ge.s32.totalorder %v408, %v422
    %vm431 = vcmp.ge.s32.totalorder %v409, %v422
    %vm432 = vcmp.ge.s32.totalorder %v410, %v422
    %vm433 = vcmp.ge.s32.totalorder %v411, %v422
    %vm434 = vcmp.ge.s32.totalorder %v412, %v422
    %vm435 = vcmp.ge.s32.totalorder %v413, %v422
    %vm436 = vcmp.ge.s32.totalorder %v414, %v422
    %vm437 = vcmp.ge.s32.totalorder %v415, %v422
    %vm438 = vcmp.ge.s32.totalorder %v416, %v422
    %v439 = vlaneseq
    %v440 = vshrl.u32 %v439, 7
    %v441 = vsub.s32 0, %v440
    %v442 = vrot.slane %v418, %v441
    %vm443 = vcmp.lt.s32.totalorder %v401, %v442
    %vm444 = vcmp.lt.s32.totalorder %v402, %v442
    %vm445 = vcmp.lt.s32.totalorder %v403, %v442
    %vm446 = vcmp.lt.s32.totalorder %v404, %v442
    %vm447 = vcmp.lt.s32.totalorder %v405, %v442
    %vm448 = vcmp.lt.s32.totalorder %v406, %v442
    %vm449 = vcmp.lt.s32.totalorder %v407, %v442
    %vm450 = vcmp.lt.s32.totalorder %v408, %v442
    %vm451 = vcmp.lt.s32.totalorder %v409, %v442
    %vm452 = vcmp.lt.s32.totalorder %v410, %v442
    %vm453 = vcmp.lt.s32.totalorder %v411, %v442
    %vm454 = vcmp.lt.s32.totalorder %v412, %v442
    %vm455 = vcmp.lt.s32.totalorder %v413, %v442
    %vm456 = vcmp.lt.s32.totalorder %v414, %v442
    %vm457 = vcmp.lt.s32.totalorder %v415, %v442
    %vm458 = vcmp.lt.s32.totalorder %v416, %v442
    %vm459 = vmand %vm423, %vm443
    %vm460 = vmand %vm424, %vm444
    %vm461 = vmand %vm425, %vm445
    %vm462 = vmand %vm426, %vm446
    %vm463 = vmand %vm427, %vm447
    %vm464 = vmand %vm428, %vm448
    %vm465 = vmand %vm429, %vm449
    %vm466 = vmand %vm430, %vm450
    %vm467 = vmand %vm431, %vm451
    %vm468 = vmand %vm432, %vm452
    %vm469 = vmand %vm433, %vm453
    %vm470 = vmand %vm434, %vm454
    %vm471 = vmand %vm435, %vm455
    %vm472 = vmand %vm436, %vm456
    %vm473 = vmand %vm437, %vm457
    %vm474 = vmand %vm438, %vm458
    %476 = vset.pattern.permute.xlu0 0
    %477 = vperm.xlu0 %476, %v366
    %v478 = vpop.permute.xlu0 %477
    %481 = vset.pattern.permute.xlu0 0
    %482 = vperm.xlu0 %481, %v367
    %v483 = vpop.permute.xlu0 %482
    %486 = vset.pattern.permute.xlu0 0
    %487 = vperm.xlu0 %486, %v368
    %v488 = vpop.permute.xlu0 %487
    %491 = vset.pattern.permute.xlu0 0
    %492 = vperm.xlu0 %491, %v369
    %v493 = vpop.permute.xlu0 %492
    %496 = vset.pattern.permute.xlu0 0
    %497 = vperm.xlu0 %496, %v370
    %v498 = vpop.permute.xlu0 %497
    %501 = vset.pattern.permute.xlu0 0
    %502 = vperm.xlu0 %501, %v371
    %v503 = vpop.permute.xlu0 %502
    %506 = vset.pattern.permute.xlu0 0
    %507 = vperm.xlu0 %506, %v372
    %v508 = vpop.permute.xlu0 %507
    %511 = vset.pattern.permute.xlu0 0
    %512 = vperm.xlu0 %511, %v373
    %v513 = vpop.permute.xlu0 %512
    %516 = vset.pattern.permute.xlu0 0
    %517 = vperm.xlu0 %516, %v374
    %v518 = vpop.permute.xlu0 %517
    %521 = vset.pattern.permute.xlu0 0
    %522 = vperm.xlu0 %521, %v375
    %v523 = vpop.permute.xlu0 %522
    %526 = vset.pattern.permute.xlu0 0
    %527 = vperm.xlu0 %526, %v376
    %v528 = vpop.permute.xlu0 %527
    %531 = vset.pattern.permute.xlu0 0
    %532 = vperm.xlu0 %531, %v377
    %v533 = vpop.permute.xlu0 %532
    %536 = vset.pattern.permute.xlu0 0
    %537 = vperm.xlu0 %536, %v378
    %v538 = vpop.permute.xlu0 %537
    %541 = vset.pattern.permute.xlu0 0
    %542 = vperm.xlu0 %541, %v379
    %v543 = vpop.permute.xlu0 %542
    %546 = vset.pattern.permute.xlu0 0
    %547 = vperm.xlu0 %546, %v380
    %v548 = vpop.permute.xlu0 %547
    %551 = vset.pattern.permute.xlu0 0
    %552 = vperm.xlu0 %551, %v381
    %v553 = vpop.permute.xlu0 %552
    %v555 = vsel %vm459, %v478, 0.0
    %v556 = vsel %vm460, %v483, 0.0
    %v557 = vsel %vm461, %v488, 0.0
    %v558 = vsel %vm462, %v493, 0.0
    %v559 = vsel %vm463, %v498, 0.0
    %v560 = vsel %vm464, %v503, 0.0
    %v561 = vsel %vm465, %v508, 0.0
    %v562 = vsel %vm466, %v513, 0.0
    %v563 = vsel %vm467, %v518, 0.0
    %v564 = vsel %vm468, %v523, 0.0
    %v565 = vsel %vm469, %v528, 0.0
    %v566 = vsel %vm470, %v533, 0.0
    %v567 = vsel %vm471, %v538, 0.0
    %v568 = vsel %vm472, %v543, 0.0
    %v569 = vsel %vm473, %v548, 0.0
    %v570 = vsel %vm474, %v553, 0.0
    %v571 = vadd.f32 %v555, %v556
    %v572 = vadd.f32 %v571, %v557
    %v573 = vadd.f32 %v572, %v558
    %v574 = vadd.f32 %v573, %v559
    %v575 = vadd.f32 %v574, %v560
    %v576 = vadd.f32 %v575, %v561
    %v577 = vadd.f32 %v576, %v562
    %v578 = vadd.f32 %v577, %v563
    %v579 = vadd.f32 %v578, %v564
    %v580 = vadd.f32 %v579, %v565
    %v581 = vadd.f32 %v580, %v566
    %v582 = vadd.f32 %v581, %v567
    %v583 = vadd.f32 %v582, %v568
    %v584 = vadd.f32 %v583, %v569
    %v585 = vadd.f32 %v584, %v570
    %v586 = vrot.slane %v585, 4
    %v587 = vadd.f32 %v585, %v586
    %v588 = vrot.slane %v587, 2
    %v589 = vadd.f32 %v587, %v588
    %v590 = vrot.slane %v589, 1
    %v591 = vadd.f32 %v589, %v590
    %592 = vst [vmem:[#allocation2] sm:$0x1] %v591
    // Predicated region
    $region10: #{tpu_custom_call.1} parent=1 // pred_check
      _
    $region11: #{tpu_custom_call.1} parent=1 // pred_check_branch
      %594 = sbr.rel (0) target = $region13
    $region12: #{tpu_custom_call.1} parent=1 // pred_region
      %s596 = ssub.s32 16, 16
      %597 = vsyncadd [#allocation3], %s596
      %s599 = sshll.u32 [#allocation2], 4
      %s600 = int_to_ptr.vmem [resolvable:$true] %s599
      %602 = dma.vmem_to_hbm [thread:$0]  %s600, 16, %s2, [#allocation3]
    $region13: #{tpu_custom_call.1} parent=1 // pred_fallthru
      _
    // Predicated region
    $region14: #{tpu_custom_call.1} parent=1 // pred_check
      _
    $region15: #{tpu_custom_call.1} parent=1 // pred_check_branch
      %604 = sbr.rel (0) target = $region17
    $region16: #{tpu_custom_call.1} parent=1 // pred_region
      %605 = dma.done [#allocation3], 16
    $region17: #{tpu_custom_call.1} parent=1 // pred_fallthru
      _
    %606 = vsyncpa [#allocation3], 1

</llo_original>
